<compile_context>
chip_gen: v7x
topology: tpu7x:2x2x1
jax: 0.10.0
libtpu: 0.0.40
codegen_flags: <defaults>
</compile_context>

<pallas_src>
from functools import partial

import numpy as np
import jax
import jax.numpy as jnp
from jax.experimental import pallas as pl
from jax.experimental.pallas import tpu as pltpu


def _rand_erase_kernel(iparams_ref, fparams_ref, x_ref, noise_ref, o_ref, *,
                       max_num, szx, szy):
    """Apply up to `max_num` erases to one (block_nc, H, W) block.

    iparams_ref (SMEM, int32): [num, stx_0, sty_0, ..., stx_{max_num-1}, sty_{max_num-1}]
    fparams_ref (SMEM, f32):   [xm, xs, mn, mx]   (stats of the ORIGINAL tensor)
    noise_ref   (VMEM, f32):   (max_num, block_nc, szx, W) standard-normal draws
    """
    # Untouched elements pass straight through (clamp is a no-op for them).
    o_ref[...] = x_ref[...]

    num = iparams_ref[0]
    xm = fparams_ref[0]
    xs = fparams_ref[1]
    mn = fparams_ref[2]
    mx = fparams_ref[3]

    w = o_ref.shape[-1]
    col = jax.lax.broadcasted_iota(jnp.int32, (1, 1, w), 2)   # tiny, built once

    for i in range(max_num):          # static unroll over the max erase count
        @pl.when(i < num)             # runtime gate: inactive erases cost nothing
        def _apply(i=i):
            stx = iparams_ref[1 + 2 * i]
            sty = iparams_ref[2 + 2 * i]
            # Rectangle-sized work only: read / modify / write the szx touched rows.
            cur = o_ref[:, pl.ds(stx, szx), :]                # (block_nc, szx, W)
            nz = noise_ref[i] * xs + xm                       # (block_nc, szx, W) f32
            nz = jnp.clip(nz, mn, mx).astype(o_ref.dtype)
            colmask = (col >= sty) & (col < sty + szy)        # (1, 1, W)
            o_ref[:, pl.ds(stx, szx), :] = jnp.where(colmask, nz, cur)


def _choose_block_nc(nc, h, w, szx, max_num, itemsize,
                     vmem_budget_bytes=8 * 1024 * 1024):
    """Largest divisor of N*C whose double-buffered working set fits the budget."""
    def working_set(bnc):
        io = 2 * 2 * bnc * h * w * itemsize          # x block + out block, 2x buffered
        nz = 2 * max_num * bnc * szx * w * 4         # noise block (f32), 2x buffered
        return io + nz
    for bnc in range(nc, 0, -1):
        if nc % bnc == 0 and working_set(bnc) <= vmem_budget_bytes:
            return bnc
    return 1


def compute_stats(x):
    """mean / unbiased std / min / max of the original tensor, as f32[4]."""
    xf = x.astype(jnp.float32)
    return jnp.stack([jnp.mean(xf), jnp.std(xf, ddof=1), jnp.min(xf), jnp.max(xf)])


def make_erase_params(key, x_shape, *, pct=0.2, max_num=4):
    """Host-side randomness of the PyTorch module (randint / random / init.normal_)."""
    n, c, h, w = x_shape
    szx = int(pct * h)
    k_num, k_pos, k_noise = jax.random.split(key, 3)
    # random.randint(0, max_num) is inclusive on both ends.
    num = jax.random.randint(k_num, (), 0, max_num + 1, dtype=jnp.int32)
    u = jax.random.uniform(k_pos, (max_num, 2))
    stx = (u[:, 0] * (1.0 - pct) * h).astype(jnp.int32)   # int(random() * (1-pct) * H)
    sty = (u[:, 1] * (1.0 - pct) * w).astype(jnp.int32)   # int(random() * (1-pct) * W)
    starts = jnp.stack([stx, sty], axis=1).reshape(-1)
    iparams = jnp.concatenate([num[None], starts]).astype(jnp.int32)
    # Standard-normal noise covering the szx rows each erase can touch
    # (only szy of the W columns are consumed inside the kernel).
    noise = jax.random.normal(k_noise, (max_num, n * c, szx, w), dtype=jnp.float32)
    return iparams, noise


def rand_erase_apply(x, iparams, fparams, noise, *, pct=0.2, max_num=4,
                     block_nc=None, vmem_limit_bytes=32 * 1024 * 1024):
    """Pallas apply pass: scatter clamped noise rectangles into x."""
    n, c, h, w = x.shape
    szx, szy = int(pct * h), int(pct * w)
    if max_num == 0 or szx == 0 or szy == 0:
        return x
    nc = n * c
    x2 = x.reshape(nc, h, w)
    itemsize = jnp.dtype(x.dtype).itemsize
    if block_nc is None:
        block_nc = _choose_block_nc(nc, h, w, szx, max_num, itemsize)
    assert nc % block_nc == 0, (nc, block_nc)

    kernel = partial(_rand_erase_kernel, max_num=max_num, szx=szx, szy=szy)
    y2 = pl.pallas_call(
        kernel,
        out_shape=jax.ShapeDtypeStruct((nc, h, w), x.dtype),
        grid=(nc // block_nc,),
        in_specs=[
            pl.BlockSpec(memory_space=pltpu.MemorySpace.SMEM),               # int params
            pl.BlockSpec(memory_space=pltpu.MemorySpace.SMEM),               # f32 stats
            pl.BlockSpec((block_nc, h, w), lambda j: (j, 0, 0)),             # x block
            pl.BlockSpec((max_num, block_nc, szx, w), lambda j: (0, j, 0, 0)),  # noise
        ],
        out_specs=pl.BlockSpec((block_nc, h, w), lambda j: (j, 0, 0)),
        compiler_params=pltpu.CompilerParams(
            dimension_semantics=("parallel",),      # shards the N*C axis over 2 TCs (v7x)
            vmem_limit_bytes=vmem_limit_bytes,
        ),
    )(iparams, fparams, x2, noise)
    return y2.reshape(n, c, h, w)


def rand_erase(x, key, *, pct=0.2, max_num=4, block_nc=None):
    """Full RandErase forward: stats + host randomness + Pallas apply pass."""
    fparams = compute_stats(x)
    iparams, noise = make_erase_params(key, x.shape, pct=pct, max_num=max_num)
    return rand_erase_apply(x, iparams, fparams, noise,
                            pct=pct, max_num=max_num, block_nc=block_nc)


def _reference(x, iparams, fparams, noise, *, pct, max_num):
    """Pure numpy reference with identical randomness (for verification)."""
    xr = np.asarray(x, dtype=np.float32)
    n, c, h, w = xr.shape
    szx, szy = int(pct * h), int(pct * w)
    xm, xs, mn, mx = [float(v) for v in np.asarray(fparams)]
    ip = np.asarray(iparams)
    nz = np.asarray(noise)
    num = int(ip[0])
    y = xr.reshape(n * c, h, w).copy()
    for i in range(num):
        stx, sty = int(ip[1 + 2 * i]), int(ip[2 + 2 * i])
        filled = np.clip(nz[i] * xs + xm, mn, mx)            # (N*C, szx, W)
        y[:, stx:stx + szx, sty:sty + szy] = filled[:, :, sty:sty + szy]
    y = np.clip(y, mn, mx)                                   # final clamp (no-op here)
    return y.reshape(n, c, h, w)


if __name__ == "__main__":
    pct, max_num = 0.2, 4
    key = jax.random.PRNGKey(0)
    k_x, k_aug = jax.random.split(key)

    # Small NCHW input consistent with the module: batch=2, channels=4, spatial=16.
    x = jax.random.normal(k_x, (2, 4, 16, 16), dtype=jnp.float32)

    fparams = compute_stats(x)
    iparams, noise = make_erase_params(k_aug, x.shape, pct=pct, max_num=max_num)

    # block_nc=4 -> a 2-step "parallel" grid over the flattened N*C axis.
    y = rand_erase_apply(x, iparams, fparams, noise, pct=pct, max_num=max_num,
                         block_nc=4)
    y = jax.block_until_ready(y)

    assert y.shape == x.shape and y.dtype == x.dtype
    assert bool(jnp.all(jnp.isfinite(y)))
    mn, mx = float(jnp.min(x)), float(jnp.max(x))
    assert bool(jnp.all(y >= mn - 1e-5)) and bool(jnp.all(y <= mx + 1e-5))

    y_ref = _reference(x, iparams, fparams, noise, pct=pct, max_num=max_num)
    assert np.allclose(np.asarray(y), y_ref, rtol=1e-5, atol=1e-5), \
        float(np.max(np.abs(np.asarray(y) - y_ref)))

    print("KERNEL_OK")
</pallas_src>

<mosaic_0001>
module attributes {stable_mosaic.version = 11 : i64} {
  func.func @_rand_erase_kernel(%arg0: i32, %arg1: memref<9xi32, #tpu.memory_space<smem>>, %arg2: memref<4xf32, #tpu.memory_space<smem>>, %arg3: memref<4x16x16xf32, #tpu.memory_space<vmem>>, %arg4: memref<4x4x3x16xf32, #tpu.memory_space<vmem>>, %arg5: memref<4x16x16xf32, #tpu.memory_space<vmem>>) attributes {dimension_semantics = [#tpu.dimension_semantics<parallel>], iteration_bounds = array<i64: 2>, scalar_prefetch = 0 : i64, scratch_operands = 0 : i64, tpu.core_type = #tpu.core_type<tc>, window_params = [{transform_indices = @transform_0, window_bounds = array<i64: 9>}, {transform_indices = @transform_1, window_bounds = array<i64: 4>}, {transform_indices = @transform_2, window_bounds = array<i64: 4, 16, 16>}, {transform_indices = @transform_3, window_bounds = array<i64: 4, 4, 3, 16>}, {transform_indices = @transform_4, window_bounds = array<i64: 4, 16, 16>}]} {
    %c0 = arith.constant 0 : index
    %c0_0 = arith.constant 0 : index
    %c0_1 = arith.constant 0 : index
    %0 = vector.load %arg3[%c0, %c0_0, %c0_1] : memref<4x16x16xf32, #tpu.memory_space<vmem>>, vector<4x16x16xf32>
    %c0_2 = arith.constant 0 : index
    %c0_3 = arith.constant 0 : index
    %c0_4 = arith.constant 0 : index
    %1 = vector.load %arg5[%c0_2, %c0_3, %c0_4] : memref<4x16x16xf32, #tpu.memory_space<vmem>>, vector<4x16x16xf32>
    tpu.vector_store %arg5[%c0_2, %c0_3, %c0_4], %0 {strides = array<i32>} : memref<4x16x16xf32, #tpu.memory_space<vmem>>, vector<4x16x16xf32>,
    %c0_5 = arith.constant 0 : index
    %2 = memref.load %arg1[%c0_5] : memref<9xi32, #tpu.memory_space<smem>>
    %c0_6 = arith.constant 0 : index
    %3 = memref.load %arg2[%c0_6] : memref<4xf32, #tpu.memory_space<smem>>
    %c1 = arith.constant 1 : index
    %4 = memref.load %arg2[%c1] : memref<4xf32, #tpu.memory_space<smem>>
    %c2 = arith.constant 2 : index
    %5 = memref.load %arg2[%c2] : memref<4xf32, #tpu.memory_space<smem>>
    %c3 = arith.constant 3 : index
    %6 = memref.load %arg2[%c3] : memref<4xf32, #tpu.memory_space<smem>>
    %7 = tpu.iota {dimensions = array<i32: 2>} : vector<1x1x16xi32>
    %c0_i32 = arith.constant 0 : i32
    %8 = arith.cmpi sgt, %2, %c0_i32 : i32
    %9 = arith.extui %8 : i1 to i32
    %c0_i32_7 = arith.constant 0 : i32
    %10 = arith.cmpi ne, %9, %c0_i32_7 : i32
    scf.if %10 {
      %c1_11 = arith.constant 1 : index
      %20 = memref.load %arg1[%c1_11] : memref<9xi32, #tpu.memory_space<smem>>
      %c2_12 = arith.constant 2 : index
      %21 = memref.load %arg1[%c2_12] : memref<9xi32, #tpu.memory_space<smem>>
      %c0_13 = arith.constant 0 : index
      %22 = arith.index_cast %20 : i32 to index
      %c0_14 = arith.constant 0 : index
      %23 = vector.load %arg5[%c0_13, %22, %c0_14] : memref<4x16x16xf32, #tpu.memory_space<vmem>>, vector<4x3x16xf32>
      %c0_15 = arith.constant 0 : index
      %c0_16 = arith.constant 0 : index
      %c0_17 = arith.constant 0 : index
      %c0_18 = arith.constant 0 : index
      %24 = vector.load %arg4[%c0_15, %c0_16, %c0_17, %c0_18] : memref<4x4x3x16xf32, #tpu.memory_space<vmem>>, vector<1x4x3x16xf32>
      %25 = vector.shape_cast %24 : vector<1x4x3x16xf32> to vector<4x3x16xf32>
      %26 = vector.broadcast %4 : f32 to vector<4x3x16xf32>
      %27 = arith.mulf %25, %26 : vector<4x3x16xf32>
      %28 = vector.broadcast %3 : f32 to vector<4x3x16xf32>
      %29 = arith.addf %27, %28 : vector<4x3x16xf32>
      %30 = vector.broadcast %5 : f32 to vector<4x3x16xf32>
      %31 = arith.maximumf %30, %29 : vector<4x3x16xf32>
      %32 = vector.broadcast %6 : f32 to vector<4x3x16xf32>
      %33 = arith.minimumf %32, %31 : vector<4x3x16xf32>
      %34 = vector.broadcast %21 : i32 to vector<1x1x16xi32>
      %35 = arith.cmpi sge, %7, %34 : vector<1x1x16xi32>
      %c3_i32_19 = arith.constant 3 : i32
      %36 = arith.addi %21, %c3_i32_19 : i32
      %37 = vector.broadcast %36 : i32 to vector<1x1x16xi32>
      %38 = arith.cmpi slt, %7, %37 : vector<1x1x16xi32>
      %39 = arith.andi %35, %38 : vector<1x1x16xi1>
      %40 = vector.shape_cast %39 : vector<1x1x16xi1> to vector<1x1x16xi1>
      %41 = vector.broadcast %40 : vector<1x1x16xi1> to vector<4x3x16xi1>
      %42 = arith.select %41, %33, %23 : vector<4x3x16xi1>, vector<4x3x16xf32>
      %c0_20 = arith.constant 0 : index
      %43 = arith.index_cast %20 : i32 to index
      %c0_21 = arith.constant 0 : index
      %44 = vector.load %arg5[%c0_20, %43, %c0_21] : memref<4x16x16xf32, #tpu.memory_space<vmem>>, vector<4x3x16xf32>
      tpu.vector_store %arg5[%c0_20, %43, %c0_21], %42 {strides = array<i32>} : memref<4x16x16xf32, #tpu.memory_space<vmem>>, vector<4x3x16xf32>,
    } else {
    }
    %c1_i32 = arith.constant 1 : i32
    %11 = arith.cmpi sgt, %2, %c1_i32 : i32
    %12 = arith.extui %11 : i1 to i32
    %c0_i32_8 = arith.constant 0 : i32
    %13 = arith.cmpi ne, %12, %c0_i32_8 : i32
    scf.if %13 {
      %c3_11 = arith.constant 3 : index
      %20 = memref.load %arg1[%c3_11] : memref<9xi32, #tpu.memory_space<smem>>
      %c4 = arith.constant 4 : index
      %21 = memref.load %arg1[%c4] : memref<9xi32, #tpu.memory_space<smem>>
      %c0_12 = arith.constant 0 : index
      %22 = arith.index_cast %20 : i32 to index
      %c0_13 = arith.constant 0 : index
      %23 = vector.load %arg5[%c0_12, %22, %c0_13] : memref<4x16x16xf32, #tpu.memory_space<vmem>>, vector<4x3x16xf32>
      %c1_14 = arith.constant 1 : index
      %c0_15 = arith.constant 0 : index
      %c0_16 = arith.constant 0 : index
      %c0_17 = arith.constant 0 : index
      %24 = vector.load %arg4[%c1_14, %c0_15, %c0_16, %c0_17] : memref<4x4x3x16xf32, #tpu.memory_space<vmem>>, vector<1x4x3x16xf32>
      %25 = vector.shape_cast %24 : vector<1x4x3x16xf32> to vector<4x3x16xf32>
      %26 = vector.broadcast %4 : f32 to vector<4x3x16xf32>
      %27 = arith.mulf %25, %26 : vector<4x3x16xf32>
      %28 = vector.broadcast %3 : f32 to vector<4x3x16xf32>
      %29 = arith.addf %27, %28 : vector<4x3x16xf32>
      %30 = vector.broadcast %5 : f32 to vector<4x3x16xf32>
      %31 = arith.maximumf %30, %29 : vector<4x3x16xf32>
      %32 = vector.broadcast %6 : f32 to vector<4x3x16xf32>
      %33 = arith.minimumf %32, %31 : vector<4x3x16xf32>
      %34 = vector.broadcast %21 : i32 to vector<1x1x16xi32>
      %35 = arith.cmpi sge, %7, %34 : vector<1x1x16xi32>
      %c3_i32_18 = arith.constant 3 : i32
      %36 = arith.addi %21, %c3_i32_18 : i32
      %37 = vector.broadcast %36 : i32 to vector<1x1x16xi32>
      %38 = arith.cmpi slt, %7, %37 : vector<1x1x16xi32>
      %39 = arith.andi %35, %38 : vector<1x1x16xi1>
      %40 = vector.shape_cast %39 : vector<1x1x16xi1> to vector<1x1x16xi1>
      %41 = vector.broadcast %40 : vector<1x1x16xi1> to vector<4x3x16xi1>
      %42 = arith.select %41, %33, %23 : vector<4x3x16xi1>, vector<4x3x16xf32>
      %c0_19 = arith.constant 0 : index
      %43 = arith.index_cast %20 : i32 to index
      %c0_20 = arith.constant 0 : index
      %44 = vector.load %arg5[%c0_19, %43, %c0_20] : memref<4x16x16xf32, #tpu.memory_space<vmem>>, vector<4x3x16xf32>
      tpu.vector_store %arg5[%c0_19, %43, %c0_20], %42 {strides = array<i32>} : memref<4x16x16xf32, #tpu.memory_space<vmem>>, vector<4x3x16xf32>,
    } else {
    }
    %c2_i32 = arith.constant 2 : i32
    %14 = arith.cmpi sgt, %2, %c2_i32 : i32
    %15 = arith.extui %14 : i1 to i32
    %c0_i32_9 = arith.constant 0 : i32
    %16 = arith.cmpi ne, %15, %c0_i32_9 : i32
    scf.if %16 {
      %c5 = arith.constant 5 : index
      %20 = memref.load %arg1[%c5] : memref<9xi32, #tpu.memory_space<smem>>
      %c6 = arith.constant 6 : index
      %21 = memref.load %arg1[%c6] : memref<9xi32, #tpu.memory_space<smem>>
      %c0_11 = arith.constant 0 : index
      %22 = arith.index_cast %20 : i32 to index
      %c0_12 = arith.constant 0 : index
      %23 = vector.load %arg5[%c0_11, %22, %c0_12] : memref<4x16x16xf32, #tpu.memory_space<vmem>>, vector<4x3x16xf32>
      %c2_13 = arith.constant 2 : index
      %c0_14 = arith.constant 0 : index
      %c0_15 = arith.constant 0 : index
      %c0_16 = arith.constant 0 : index
      %24 = vector.load %arg4[%c2_13, %c0_14, %c0_15, %c0_16] : memref<4x4x3x16xf32, #tpu.memory_space<vmem>>, vector<1x4x3x16xf32>
      %25 = vector.shape_cast %24 : vector<1x4x3x16xf32> to vector<4x3x16xf32>
      %26 = vector.broadcast %4 : f32 to vector<4x3x16xf32>
      %27 = arith.mulf %25, %26 : vector<4x3x16xf32>
      %28 = vector.broadcast %3 : f32 to vector<4x3x16xf32>
      %29 = arith.addf %27, %28 : vector<4x3x16xf32>
      %30 = vector.broadcast %5 : f32 to vector<4x3x16xf32>
      %31 = arith.maximumf %30, %29 : vector<4x3x16xf32>
      %32 = vector.broadcast %6 : f32 to vector<4x3x16xf32>
      %33 = arith.minimumf %32, %31 : vector<4x3x16xf32>
      %34 = vector.broadcast %21 : i32 to vector<1x1x16xi32>
      %35 = arith.cmpi sge, %7, %34 : vector<1x1x16xi32>
      %c3_i32_17 = arith.constant 3 : i32
      %36 = arith.addi %21, %c3_i32_17 : i32
      %37 = vector.broadcast %36 : i32 to vector<1x1x16xi32>
      %38 = arith.cmpi slt, %7, %37 : vector<1x1x16xi32>
      %39 = arith.andi %35, %38 : vector<1x1x16xi1>
      %40 = vector.shape_cast %39 : vector<1x1x16xi1> to vector<1x1x16xi1>
      %41 = vector.broadcast %40 : vector<1x1x16xi1> to vector<4x3x16xi1>
      %42 = arith.select %41, %33, %23 : vector<4x3x16xi1>, vector<4x3x16xf32>
      %c0_18 = arith.constant 0 : index
      %43 = arith.index_cast %20 : i32 to index
      %c0_19 = arith.constant 0 : index
      %44 = vector.load %arg5[%c0_18, %43, %c0_19] : memref<4x16x16xf32, #tpu.memory_space<vmem>>, vector<4x3x16xf32>
      tpu.vector_store %arg5[%c0_18, %43, %c0_19], %42 {strides = array<i32>} : memref<4x16x16xf32, #tpu.memory_space<vmem>>, vector<4x3x16xf32>,
    } else {
    }
    %c3_i32 = arith.constant 3 : i32
    %17 = arith.cmpi sgt, %2, %c3_i32 : i32
    %18 = arith.extui %17 : i1 to i32
    %c0_i32_10 = arith.constant 0 : i32
    %19 = arith.cmpi ne, %18, %c0_i32_10 : i32
    scf.if %19 {
      %c7 = arith.constant 7 : index
      %20 = memref.load %arg1[%c7] : memref<9xi32, #tpu.memory_space<smem>>
      %c8 = arith.constant 8 : index
      %21 = memref.load %arg1[%c8] : memref<9xi32, #tpu.memory_space<smem>>
      %c0_11 = arith.constant 0 : index
      %22 = arith.index_cast %20 : i32 to index
      %c0_12 = arith.constant 0 : index
      %23 = vector.load %arg5[%c0_11, %22, %c0_12] : memref<4x16x16xf32, #tpu.memory_space<vmem>>, vector<4x3x16xf32>
      %c3_13 = arith.constant 3 : index
      %c0_14 = arith.constant 0 : index
      %c0_15 = arith.constant 0 : index
      %c0_16 = arith.constant 0 : index
      %24 = vector.load %arg4[%c3_13, %c0_14, %c0_15, %c0_16] : memref<4x4x3x16xf32, #tpu.memory_space<vmem>>, vector<1x4x3x16xf32>
      %25 = vector.shape_cast %24 : vector<1x4x3x16xf32> to vector<4x3x16xf32>
      %26 = vector.broadcast %4 : f32 to vector<4x3x16xf32>
      %27 = arith.mulf %25, %26 : vector<4x3x16xf32>
      %28 = vector.broadcast %3 : f32 to vector<4x3x16xf32>
      %29 = arith.addf %27, %28 : vector<4x3x16xf32>
      %30 = vector.broadcast %5 : f32 to vector<4x3x16xf32>
      %31 = arith.maximumf %30, %29 : vector<4x3x16xf32>
      %32 = vector.broadcast %6 : f32 to vector<4x3x16xf32>
      %33 = arith.minimumf %32, %31 : vector<4x3x16xf32>
      %34 = vector.broadcast %21 : i32 to vector<1x1x16xi32>
      %35 = arith.cmpi sge, %7, %34 : vector<1x1x16xi32>
      %c3_i32_17 = arith.constant 3 : i32
      %36 = arith.addi %21, %c3_i32_17 : i32
      %37 = vector.broadcast %36 : i32 to vector<1x1x16xi32>
      %38 = arith.cmpi slt, %7, %37 : vector<1x1x16xi32>
      %39 = arith.andi %35, %38 : vector<1x1x16xi1>
      %40 = vector.shape_cast %39 : vector<1x1x16xi1> to vector<1x1x16xi1>
      %41 = vector.broadcast %40 : vector<1x1x16xi1> to vector<4x3x16xi1>
      %42 = arith.select %41, %33, %23 : vector<4x3x16xi1>, vector<4x3x16xf32>
      %c0_18 = arith.constant 0 : index
      %43 = arith.index_cast %20 : i32 to index
      %c0_19 = arith.constant 0 : index
      %44 = vector.load %arg5[%c0_18, %43, %c0_19] : memref<4x16x16xf32, #tpu.memory_space<vmem>>, vector<4x3x16xf32>
      tpu.vector_store %arg5[%c0_18, %43, %c0_19], %42 {strides = array<i32>} : memref<4x16x16xf32, #tpu.memory_space<vmem>>, vector<4x3x16xf32>,
    } else {
    }
    return
  }
  func.func @transform_0(%arg0: i32) -> i32 {
    %c0_i32 = arith.constant 0 : i32
    %c0_i32_0 = arith.constant 0 : i32
    return %c0_i32 : i32
  }
  func.func @transform_1(%arg0: i32) -> i32 {
    %c0_i32 = arith.constant 0 : i32
    %c0_i32_0 = arith.constant 0 : i32
    return %c0_i32 : i32
  }
  func.func @transform_2(%arg0: i32) -> (i32, i32, i32) {
    %c0_i32 = arith.constant 0 : i32
    %c0_i32_0 = arith.constant 0 : i32
    %c0_i32_1 = arith.constant 0 : i32
    return %arg0, %c0_i32, %c0_i32_0 : i32, i32, i32
  }
  func.func @transform_3(%arg0: i32) -> (i32, i32, i32, i32) {
    %c0_i32 = arith.constant 0 : i32
    %c0_i32_0 = arith.constant 0 : i32
    %c0_i32_1 = arith.constant 0 : i32
    %c0_i32_2 = arith.constant 0 : i32
    return %c0_i32, %arg0, %c0_i32_0, %c0_i32_1 : i32, i32, i32, i32
  }
  func.func @transform_4(%arg0: i32) -> (i32, i32, i32) {
    %c0_i32 = arith.constant 0 : i32
    %c0_i32_0 = arith.constant 0 : i32
    %c0_i32_1 = arith.constant 0 : i32
    return %arg0, %c0_i32, %c0_i32_0 : i32, i32, i32
  }
}

</mosaic_0001>

<llo_original>
// kernel: tpu_custom_call.1
$region0: #{tpu_custom_call.1}
  #allocation0 [shape = 'u32[]', space=smem, size = 0x4, offset = 0x4, fixed_abs, tag = 'smem constant byte address 0x4 - core index']
  #allocation1 [shape = 'u32[144,128]{1,0:T(1,128)}', space=vmem, size = 0x12000, scoped, tag = 'internal scratch']
  %s0 = inlined_call_operand.vmem [shape: s32[9], index: 0, kind: input, shape index: {}]
  %s1 = inlined_call_operand.vmem [shape: f32[4], index: 1, kind: input, shape index: {}]
  %s2 = inlined_call_operand.vmem [shape: f32[8,16,16], index: 2, kind: input, shape index: {}]
  %s3 = inlined_call_operand.vmem [shape: f32[4,8,3,16], index: 3, kind: input, shape index: {}]
  %s4 = inlined_call_operand.hbm [shape: f32[8,16,16], index: 4, kind: output, shape index: {}]
  %s5 = sld [smem:[#allocation0]]
  $region114: #{tpu_custom_call.1} parent=0
    _
  %s7 = ssub.s32 1, %s5
  %s8 = scalar_select 0, %s7, %s5
  $region1: #{tpu_custom_call.1} parent=0
    #allocation2 [shape = 'u8[512]{0}', space=smem, size = 0x200, scoped, tag = 'input window, operand 0, single buffered']
    #allocation3 [shape = 's32[2]{0}', space=sflag, size = 0x8, scoped, tag = 'scoped memory for tpu_custom_call.1']
    #allocation4 [shape = 's32[2]{0}', space=sflag, size = 0x8, scoped, tag = 'scoped memory for tpu_custom_call.1']
    #allocation5 [shape = 'u8[512]{0}', space=smem, size = 0x200, scoped, tag = 'input window, operand 1, single buffered']
    #allocation6 [shape = 's32[1]{0}', space=sflag, size = 0x4, scoped, tag = 'scoped memory for tpu_custom_call.1']
    #allocation7 [shape = 'u8[65536]{0}', space=vmem, size = 0x10000, scoped, tag = 'input window, operand 3']
    #allocation8 [shape = 'u8[65536]{0}', space=vmem, size = 0x10000, scoped, tag = 'output window, operand 0']
    %9 = vsyncpa [#allocation4], 0
    %10 = vsyncpa [#allocation6], 0
    %11 = vsyncpa [#allocation3], 0
    %s12 = scalar_lea.sflag [#allocation3], 1
    %13 = vsyncpa %s12, 0
    loop: start=0, step=1, limit=4
    $region2: #{tpu_custom_call.1} parent=1 // loop_pre_header
      _
    $region3: #{tpu_custom_call.1} parent=1 // loop_header
      %s15 = sphi 0, %s19
      %p16 = scmp.ge.s32.totalorder %s15, 4
      %s23 = sphi 0, %s23
      %s25 = sphi 0, %s23
      %s26 = sphi 0, %s25
      %s40 = sphi 0, %s26
      %s44 = sphi 0, %s44
      %s46 = sphi 0, %s44
      %s47 = sphi 0, %s46
      %s61 = sphi 0, %s47
      %s67 = sphi 0, %s69
      %s70 = sphi 0, %s67
      %s71 = sphi 0, %s70
      %s87 = sphi 0, %s71
      %s93 = sphi 0, %s95
      %s96 = sphi 0, %s93
      %s97 = sphi 0, %s96
      %s113 = sphi 0, %s97
      %s119 = sphi 0, %s121
      %s122 = sphi 0, %s119
      %s123 = sphi 0, %s122
      %s139 = sphi 0, %s123
    $region4: #{tpu_custom_call.1} parent=1 // loop_header_branch
      %18 = sbr.rel (%p16) target = $region8
    $region5: #{tpu_custom_call.1} parent=1 // loop_body
      %s20 = ssub.s32 %s15, 1
      %s21 = ssub.s32 %s15, 2
      %s22 = sadd.s32 %s15, 1
      %s24 = sadd.s32 %s23, 1
      %p27 = scmp.eq.s32.totalorder %s15, 1
      %p28 = scmp.ne.s32.totalorder %s23, %s25
      %p29 = scmp.eq.s32.totalorder %s15, 0
      %p30 = por %p28, %p29
      %p31 = scmp.ne.s32.totalorder %s23, %s25
      %p32 = scmp.eq.s32.totalorder %s20, 1
      %p33 = por %p31, %p32
      %p34 = scmp.ne.s32.totalorder %s25, %s26
      %p35 = scmp.eq.s32.totalorder %s20, 0
      %p36 = por %p34, %p35
      %p37 = scmp.ne.s32.totalorder %s25, %s26
      %p38 = scmp.eq.s32.totalorder %s21, 1
      %p39 = por %p37, %p38
      %p41 = scmp.ne.s32.totalorder %s26, %s40
      %p42 = scmp.eq.s32.totalorder %s21, 0
      %p43 = por %p41, %p42
      %s45 = sadd.s32 %s44, 1
      %p48 = scmp.eq.s32.totalorder %s15, 1
      %p49 = scmp.ne.s32.totalorder %s44, %s46
      %p50 = scmp.eq.s32.totalorder %s15, 0
      %p51 = por %p49, %p50
      %p52 = scmp.ne.s32.totalorder %s44, %s46
      %p53 = scmp.eq.s32.totalorder %s20, 1
      %p54 = por %p52, %p53
      %p55 = scmp.ne.s32.totalorder %s46, %s47
      %p56 = scmp.eq.s32.totalorder %s20, 0
      %p57 = por %p55, %p56
      %p58 = scmp.ne.s32.totalorder %s46, %s47
      %p59 = scmp.eq.s32.totalorder %s21, 1
      %p60 = por %p58, %p59
      %p62 = scmp.ne.s32.totalorder %s47, %s61
      %p63 = scmp.eq.s32.totalorder %s21, 0
      %p64 = por %p62, %p63
      %s65 = ssub.s32 %s15, %s22
      %p66 = scmp.eq.s32.totalorder %s65, 0
      %s68 = sadd.s32 %s67, 1
      %s69 = scalar_select %p66, %s67, %s68
      %p72 = pneg %p66
      %p73 = scmp.eq.s32.totalorder %s15, 1
      %p74 = por %p72, %p73
      %p75 = scmp.ne.s32.totalorder %s67, %s70
      %p76 = scmp.eq.s32.totalorder %s15, 0
      %p77 = por %p75, %p76
      %p78 = scmp.ne.s32.totalorder %s67, %s70
      %p79 = scmp.eq.s32.totalorder %s20, 1
      %p80 = por %p78, %p79
      %p81 = scmp.ne.s32.totalorder %s70, %s71
      %p82 = scmp.eq.s32.totalorder %s20, 0
      %p83 = por %p81, %p82
      %p84 = scmp.ne.s32.totalorder %s70, %s71
      %p85 = scmp.eq.s32.totalorder %s21, 1
      %p86 = por %p84, %p85
      %p88 = scmp.ne.s32.totalorder %s71, %s87
      %p89 = scmp.eq.s32.totalorder %s21, 0
      %p90 = por %p88, %p89
      %s91 = ssub.s32 %s15, %s22
      %p92 = scmp.eq.s32.totalorder %s91, 0
      %s94 = sadd.s32 %s93, 1
      %s95 = scalar_select %p92, %s93, %s94
      %p98 = pneg %p92
      %p99 = scmp.eq.s32.totalorder %s15, 1
      %p100 = por %p98, %p99
      %p101 = scmp.ne.s32.totalorder %s93, %s96
      %p102 = scmp.eq.s32.totalorder %s15, 0
      %p103 = por %p101, %p102
      %p104 = scmp.ne.s32.totalorder %s93, %s96
      %p105 = scmp.eq.s32.totalorder %s20, 1
      %p106 = por %p104, %p105
      %p107 = scmp.ne.s32.totalorder %s96, %s97
      %p108 = scmp.eq.s32.totalorder %s20, 0
      %p109 = por %p107, %p108
      %p110 = scmp.ne.s32.totalorder %s96, %s97
      %p111 = scmp.eq.s32.totalorder %s21, 1
      %p112 = por %p110, %p111
      %p114 = scmp.ne.s32.totalorder %s97, %s113
      %p115 = scmp.eq.s32.totalorder %s21, 0
      %p116 = por %p114, %p115
      %s117 = ssub.s32 %s15, %s22
      %p118 = scmp.eq.s32.totalorder %s117, 0
      %s120 = sadd.s32 %s119, 1
      %s121 = scalar_select %p118, %s119, %s120
      %p124 = pneg %p118
      %p125 = scmp.eq.s32.totalorder %s15, 1
      %p126 = por %p124, %p125
      %p127 = scmp.ne.s32.totalorder %s119, %s122
      %p128 = scmp.eq.s32.totalorder %s15, 0
      %p129 = por %p127, %p128
      %p130 = scmp.ne.s32.totalorder %s119, %s122
      %p131 = scmp.eq.s32.totalorder %s20, 1
      %p132 = por %p130, %p131
      %p133 = scmp.ne.s32.totalorder %s122, %s123
      %p134 = scmp.eq.s32.totalorder %s20, 0
      %p135 = por %p133, %p134
      %p136 = scmp.ne.s32.totalorder %s122, %s123
      %p137 = scmp.eq.s32.totalorder %s21, 1
      %p138 = por %p136, %p137
      %p140 = scmp.ne.s32.totalorder %s123, %s139
      %p141 = scmp.eq.s32.totalorder %s21, 0
      %p142 = por %p140, %p141
      %p143 = scmp.le.s32.totalorder 1, %s15
      %p144 = scmp.lt.s32.totalorder %s15, 3
      %p145 = pnand %p143, %p144
      %p146 = pneg %p145
      // Predicated region
      $region9: #{tpu_custom_call.1} parent=5 // pred_check
        _
      $region10: #{tpu_custom_call.1} parent=5 // pred_check_branch
        %148 = sbr.rel (%p145) target = $region12
      $region11: #{tpu_custom_call.1} parent=5 // pred_region
        %s149 = ssub.s32 %s15, 1
        // Predicated region
        $region13: #{tpu_custom_call.1} parent=11 // pred_check
          %p150 = pneg %p36
        $region14: #{tpu_custom_call.1} parent=11 // pred_check_branch
          %152 = sbr.rel (%p150) target = $region16
        $region15: #{tpu_custom_call.1} parent=11 // pred_region
          %s154 = ssub.s32 16, 16
          %155 = vsyncadd [#allocation4], %s154
          %s157 = sshll.u32 %s0, 4
          %s158 = int_to_ptr.vmem [resolvable:$true] %s157
          %160 = dma.vmem_to_smem %s158, 16, [#allocation2], [#allocation4]
        $region16: #{tpu_custom_call.1} parent=11 // pred_fallthru
          _
        // Predicated region
        $region17: #{tpu_custom_call.1} parent=11 // pred_check
          %p161 = pneg %p57
        $region18: #{tpu_custom_call.1} parent=11 // pred_check_branch
          %163 = sbr.rel (%p161) target = $region20
        $region19: #{tpu_custom_call.1} parent=11 // pred_region
          %s165 = ssub.s32 16, 16
          %166 = vsyncadd [#allocation6], %s165
          %s168 = sshll.u32 %s1, 4
          %s169 = int_to_ptr.vmem [resolvable:$true] %s168
          %171 = dma.vmem_to_smem %s169, 16, [#allocation5], [#allocation6]
        $region20: #{tpu_custom_call.1} parent=11 // pred_fallthru
          _
      $region12: #{tpu_custom_call.1} parent=5 // pred_fallthru
        _
      %p172 = scmp.lt.s32.totalorder %s15, 2
      // Predicated region
      $region21: #{tpu_custom_call.1} parent=5 // pred_check
        %p173 = pneg %p172
      $region22: #{tpu_custom_call.1} parent=5 // pred_check_branch
        %175 = sbr.rel (%p173) target = $region24
      $region23: #{tpu_custom_call.1} parent=5 // pred_region
        // Predicated region
        $region25: #{tpu_custom_call.1} parent=23 // pred_check
          %p176 = pneg %p77
        $region26: #{tpu_custom_call.1} parent=23 // pred_check_branch
          %178 = sbr.rel (%p176) target = $region28
        $region27: #{tpu_custom_call.1} parent=23 // pred_region
          %s179 = smul.u32 4, %s15
          %p180 = scmp.lt.s32.totalorder %s179, 7
          %s181 = scalar_select %p180, %s179, 7
          %s182 = smul.addr %s181, 2
          %s183 = smul.addr %s182, 8
          %s184 = scalar_lea.vmem %s2, %s183
          %s185 = smul.u32 4, %s15
        $region28: #{tpu_custom_call.1} parent=23 // pred_fallthru
          _
        // Predicated region
        $region29: #{tpu_custom_call.1} parent=23 // pred_check
          %p186 = pneg %p103
        $region30: #{tpu_custom_call.1} parent=23 // pred_check_branch
          %188 = sbr.rel (%p186) target = $region32
        $region31: #{tpu_custom_call.1} parent=23 // pred_region
          %s189 = sand.u32 %s93, 1
          %s190 = sand.u32 %s93, 1
          %s191 = smul.addr %s190, 64
          %s192 = scalar_lea.vmem [#allocation7], %s191
          %s193 = smul.u32 4, %s15
          %s194 = smul.addr %s193, 4
          %s195 = scalar_lea.vmem %s3, %s194
          // Predicated region
          $region33: #{tpu_custom_call.1} parent=31 // pred_check
            _
          $region34: #{tpu_custom_call.1} parent=31 // pred_check_branch
            %197 = sbr.rel (0) target = $region36
          $region35: #{tpu_custom_call.1} parent=31 // pred_region
            // Predicated region
            $region37: #{tpu_custom_call.1} parent=35 // pred_check
              _
            $region38: #{tpu_custom_call.1} parent=35 // pred_check_branch
              %199 = sbr.rel target = $region40
            $region39: #{tpu_custom_call.1} parent=35 // pred_region
              // Predicated region
              $region52: #{tpu_custom_call.1} parent=39 // pred_check
                _
              $region53: #{tpu_custom_call.1} parent=39 // pred_check_branch
                %244 = sbr.rel (0) target = $region55
              $region54: #{tpu_custom_call.1} parent=39 // pred_region
                loop: start=0, step=1, limit=1
                $region56: #{tpu_custom_call.1} parent=54 // loop_pre_header
                  _
                $region57: #{tpu_custom_call.1} parent=54 // loop_header
                  %s246 = sphi 0, %s250
                  %p247 = scmp.ge.s32.totalorder %s246, 1
                  %s251 = sphi %s195, %s195
                  %s252 = sphi %s192, %s192
                $region58: #{tpu_custom_call.1} parent=54 // loop_header_branch
                  %249 = sbr.rel (%p247) target = $region62
                $region59: #{tpu_custom_call.1} parent=54 // loop_body
                  _
                $region60: #{tpu_custom_call.1} parent=54 // loop_footer
                  %s250 = sadd.s32 1, %s246
                $region61: #{tpu_custom_call.1} parent=54 // loop_footer_branch
                  %245 = sbr.rel target = $region57
                $region62: #{tpu_custom_call.1} parent=54 // loop_exit
                  _
                loop: start=0, step=1, limit=1
                $region63: #{tpu_custom_call.1} parent=54 // loop_pre_header
                  _
                $region64: #{tpu_custom_call.1} parent=54 // loop_header
                  %s255 = sphi 0, %s259
                  %p256 = scmp.ge.s32.totalorder %s255, 1
                  %s260 = sphi %s195, %s195
                  %s261 = sphi %s192, %s192
                $region65: #{tpu_custom_call.1} parent=54 // loop_header_branch
                  %258 = sbr.rel (%p256) target = $region69
                $region66: #{tpu_custom_call.1} parent=54 // loop_body
                  %v262 = vld [vmem:[%s260] sm:$0xf]
                  %263 = vst [vmem:[%s261] sm:$0xf] %v262
                  %v264 = vld [vmem:[%s260 + $0x4] sm:$0xf]
                  %265 = vst [vmem:[%s261 + $0x4] sm:$0xf] %v264
                  %v266 = vld [vmem:[%s260 + $0x8] sm:$0xf]
                  %267 = vst [vmem:[%s261 + $0x8] sm:$0xf] %v266
                  %v268 = vld [vmem:[%s260 + $0xc] sm:$0xf]
                  %269 = vst [vmem:[%s261 + $0xc] sm:$0xf] %v268
                  %v270 = vld [vmem:[%s260 + $0x20] sm:$0xf]
                  %271 = vst [vmem:[%s261 + $0x10] sm:$0xf] %v270
                  %v272 = vld [vmem:[%s260 + $0x24] sm:$0xf]
                  %273 = vst [vmem:[%s261 + $0x14] sm:$0xf] %v272
                  %v274 = vld [vmem:[%s260 + $0x28] sm:$0xf]
                  %275 = vst [vmem:[%s261 + $0x18] sm:$0xf] %v274
                  %v276 = vld [vmem:[%s260 + $0x2c] sm:$0xf]
                  %277 = vst [vmem:[%s261 + $0x1c] sm:$0xf] %v276
                  %v278 = vld [vmem:[%s260 + $0x40] sm:$0xf]
                  %279 = vst [vmem:[%s261 + $0x20] sm:$0xf] %v278
                  %v280 = vld [vmem:[%s260 + $0x44] sm:$0xf]
                  %281 = vst [vmem:[%s261 + $0x24] sm:$0xf] %v280
                  %v282 = vld [vmem:[%s260 + $0x48] sm:$0xf]
                  %283 = vst [vmem:[%s261 + $0x28] sm:$0xf] %v282
                  %v284 = vld [vmem:[%s260 + $0x4c] sm:$0xf]
                  %285 = vst [vmem:[%s261 + $0x2c] sm:$0xf] %v284
                  %v286 = vld [vmem:[%s260 + $0x60] sm:$0xf]
                  %287 = vst [vmem:[%s261 + $0x30] sm:$0xf] %v286
                  %v288 = vld [vmem:[%s260 + $0x64] sm:$0xf]
                  %289 = vst [vmem:[%s261 + $0x34] sm:$0xf] %v288
                  %v290 = vld [vmem:[%s260 + $0x68] sm:$0xf]
                  %291 = vst [vmem:[%s261 + $0x38] sm:$0xf] %v290
                  %v292 = vld [vmem:[%s260 + $0x6c] sm:$0xf]
                  %293 = vst [vmem:[%s261 + $0x3c] sm:$0xf] %v292
                $region67: #{tpu_custom_call.1} parent=54 // loop_footer
                  %s259 = sadd.s32 1, %s255
                $region68: #{tpu_custom_call.1} parent=54 // loop_footer_branch
                  %254 = sbr.rel target = $region64
                $region69: #{tpu_custom_call.1} parent=54 // loop_exit
                  _
              $region55: #{tpu_custom_call.1} parent=39 // pred_fallthru
                _
            $region40: #{tpu_custom_call.1} parent=35 // pred_fallthru
              _
            // Predicated region
            $region41: #{tpu_custom_call.1} parent=35 // pred_check
              _
            $region42: #{tpu_custom_call.1} parent=35 // pred_check_branch
              %201 = sbr.rel (0) target = $region44
            $region43: #{tpu_custom_call.1} parent=35 // pred_region
              loop: start=0, step=1, limit=1
              $region45: #{tpu_custom_call.1} parent=43 // loop_pre_header
                _
              $region46: #{tpu_custom_call.1} parent=43 // loop_header
                %s204 = sphi 0, %s208
                %p205 = scmp.ge.s32.totalorder %s204, 1
                %s209 = sphi %s195, %s195
                %s210 = sphi %s192, %s192
              $region47: #{tpu_custom_call.1} parent=43 // loop_header_branch
                %207 = sbr.rel (%p205) target = $region51
              $region48: #{tpu_custom_call.1} parent=43 // loop_body
                %v211 = vld [vmem:[%s209] sm:$0xf]
                %212 = vst [vmem:[%s210] sm:$0xf] %v211
                %v213 = vld [vmem:[%s209 + $0x4] sm:$0xf]
                %214 = vst [vmem:[%s210 + $0x4] sm:$0xf] %v213
                %v215 = vld [vmem:[%s209 + $0x8] sm:$0xf]
                %216 = vst [vmem:[%s210 + $0x8] sm:$0xf] %v215
                %v217 = vld [vmem:[%s209 + $0xc] sm:$0xf]
                %218 = vst [vmem:[%s210 + $0xc] sm:$0xf] %v217
                %v219 = vld [vmem:[%s209 + $0x20] sm:$0xf]
                %220 = vst [vmem:[%s210 + $0x10] sm:$0xf] %v219
                %v221 = vld [vmem:[%s209 + $0x24] sm:$0xf]
                %222 = vst [vmem:[%s210 + $0x14] sm:$0xf] %v221
                %v223 = vld [vmem:[%s209 + $0x28] sm:$0xf]
                %224 = vst [vmem:[%s210 + $0x18] sm:$0xf] %v223
                %v225 = vld [vmem:[%s209 + $0x2c] sm:$0xf]
                %226 = vst [vmem:[%s210 + $0x1c] sm:$0xf] %v225
                %v227 = vld [vmem:[%s209 + $0x40] sm:$0xf]
                %228 = vst [vmem:[%s210 + $0x20] sm:$0xf] %v227
                %v229 = vld [vmem:[%s209 + $0x44] sm:$0xf]
                %230 = vst [vmem:[%s210 + $0x24] sm:$0xf] %v229
                %v231 = vld [vmem:[%s209 + $0x48] sm:$0xf]
                %232 = vst [vmem:[%s210 + $0x28] sm:$0xf] %v231
                %v233 = vld [vmem:[%s209 + $0x4c] sm:$0xf]
                %234 = vst [vmem:[%s210 + $0x2c] sm:$0xf] %v233
                %v235 = vld [vmem:[%s209 + $0x60] sm:$0xf]
                %236 = vst [vmem:[%s210 + $0x30] sm:$0xf] %v235
                %v237 = vld [vmem:[%s209 + $0x64] sm:$0xf]
                %238 = vst [vmem:[%s210 + $0x34] sm:$0xf] %v237
                %v239 = vld [vmem:[%s209 + $0x68] sm:$0xf]
                %240 = vst [vmem:[%s210 + $0x38] sm:$0xf] %v239
                %v241 = vld [vmem:[%s209 + $0x6c] sm:$0xf]
                %242 = vst [vmem:[%s210 + $0x3c] sm:$0xf] %v241
              $region49: #{tpu_custom_call.1} parent=43 // loop_footer
                %s208 = sadd.s32 1, %s204
              $region50: #{tpu_custom_call.1} parent=43 // loop_footer_branch
                %203 = sbr.rel target = $region46
              $region51: #{tpu_custom_call.1} parent=43 // loop_exit
                _
            $region44: #{tpu_custom_call.1} parent=35 // pred_fallthru
              _
          $region36: #{tpu_custom_call.1} parent=31 // pred_fallthru
            _
          %294 = vnop
        $region32: #{tpu_custom_call.1} parent=23 // pred_fallthru
          _
      $region24: #{tpu_custom_call.1} parent=5 // pred_fallthru
        _
      %p295 = scmp.le.s32.totalorder 1, %s15
      %p296 = scmp.lt.s32.totalorder %s15, 3
      %p297 = pnand %p295, %p296
      %p298 = pneg %p297
      // Predicated region
      $region70: #{tpu_custom_call.1} parent=5 // pred_check
        _
      $region71: #{tpu_custom_call.1} parent=5 // pred_check_branch
        %300 = sbr.rel (%p297) target = $region73
      $region72: #{tpu_custom_call.1} parent=5 // pred_region
        %s301 = ssub.s32 %s15, 1
        // Predicated region
        $region74: #{tpu_custom_call.1} parent=72 // pred_check
          %p302 = pneg %p36
        $region75: #{tpu_custom_call.1} parent=72 // pred_check_branch
          %304 = sbr.rel (%p302) target = $region77
        $region76: #{tpu_custom_call.1} parent=72 // pred_region
          %305 = dma.done [#allocation4], 16
        $region77: #{tpu_custom_call.1} parent=72 // pred_fallthru
          _
        // Predicated region
        $region78: #{tpu_custom_call.1} parent=72 // pred_check
          %p306 = pneg %p57
        $region79: #{tpu_custom_call.1} parent=72 // pred_check_branch
          %308 = sbr.rel (%p306) target = $region81
        $region80: #{tpu_custom_call.1} parent=72 // pred_region
          %309 = dma.done [#allocation6], 16
        $region81: #{tpu_custom_call.1} parent=72 // pred_fallthru
          _
        %s310 = sand.u32 %s96, 1
        %s311 = sand.u32 %s96, 1
        %s312 = smul.addr %s311, 64
        %s313 = scalar_lea.vmem [#allocation7], %s312
        // Predicated region
        $region82: #{tpu_custom_call.1} parent=72 // pred_check
          %p314 = pneg %p109
        $region83: #{tpu_custom_call.1} parent=72 // pred_check_branch
          %316 = sbr.rel (%p314) target = $region85
        $region84: #{tpu_custom_call.1} parent=72 // pred_region
          _
        $region85: #{tpu_custom_call.1} parent=72 // pred_fallthru
          _
        %317 = sfence
        %p318 = pneg %p36
        %p319 = pneg %p33
        %p320 = pneg %p57
        %p321 = pneg %p54
        %s322 = smul.u32 4, %s20
        %p323 = scmp.lt.s32.totalorder %s322, 7
        %s324 = scalar_select %p323, %s322, 7
        %s325 = smul.addr %s324, 2
        %s326 = smul.addr %s325, 8
        %s327 = scalar_lea.vmem %s2, %s326
        %p328 = pneg %p83
        %p329 = pneg %p80
        %s330 = sand.u32 %s96, 1
        %s331 = sand.u32 %s96, 1
        %s332 = smul.addr %s331, 64
        %s333 = scalar_lea.vmem [#allocation7], %s332
        %p334 = pneg %p109
        %p335 = pneg %p106
        %p336 = pneg %p135
        %p337 = pneg %p132
        %s338 = sand.u32 %s122, 1
        %s339 = scalar_lea.sflag [#allocation3], %s338
        %s340 = sand.u32 %s122, 1
        %s341 = smul.addr %s340, 64
        %s342 = scalar_lea.vmem [#allocation8], %s341
        %s343 = smul.u32 4, %s20
        %p344 = scmp.lt.s32.totalorder %s343, 7
        %s345 = scalar_select %p344, %s343, 7
        %s346 = smul.addr %s345, 2
        %s347 = smul.addr %s346, 8
        %s348 = scalar_lea.vmem %s2, %s347
        %s349 = smul.u32 4, %s20
        %s350 = smul.u32 4, %s20
        %s351 = smul.u32 4, %s20
        %v352 = vld [vmem:[%s348] sm:$0xff]
        %v353 = vld [vmem:[%s348 + $0x8] sm:$0xff]
        %v354 = vld [vmem:[%s348 + $0x10] sm:$0xff]
        %v355 = vld [vmem:[%s348 + $0x18] sm:$0xff]
        %v356 = vld [vmem:[%s348 + $0x20] sm:$0xff]
        %v357 = vld [vmem:[%s348 + $0x28] sm:$0xff]
        %v358 = vld [vmem:[%s348 + $0x30] sm:$0xff]
        %v359 = vld [vmem:[%s348 + $0x38] sm:$0xff]
        %vm360 = vcmask 130048
        %361 = vst.msk [vmem:[%s342] sm:$0xff] %vm360, %v352
        %362 = vst.msk [vmem:[%s342 + $0x8] sm:$0xff] %vm360, %v353
        %363 = vst.msk [vmem:[%s342 + $0x10] sm:$0xff] %vm360, %v354
        %364 = vst.msk [vmem:[%s342 + $0x18] sm:$0xff] %vm360, %v355
        %365 = vst.msk [vmem:[%s342 + $0x20] sm:$0xff] %vm360, %v356
        %366 = vst.msk [vmem:[%s342 + $0x28] sm:$0xff] %vm360, %v357
        %367 = vst.msk [vmem:[%s342 + $0x30] sm:$0xff] %vm360, %v358
        %368 = vst.msk [vmem:[%s342 + $0x38] sm:$0xff] %vm360, %v359
        %s369 = sld [smem:[#allocation2]]
        %s370 = sld [smem:[#allocation5]]
        %s371 = sld [smem:[#allocation5 + $0x1]]
        %s372 = sld [smem:[#allocation5 + $0x2]]
        %s373 = sld [smem:[#allocation5 + $0x3]]
        %v374 = vlaneseq
        %v375 = vand.u32 %v374, 127
        %p376 = scmp.gt.s32.totalorder %s369, 0
        // Predicated region
        $region86: #{tpu_custom_call.1} parent=72 // pred_check
          %p377 = pneg %p376
        $region87: #{tpu_custom_call.1} parent=72 // pred_check_branch
          %379 = sbr.rel (%p377) target = $region89
        $region88: #{tpu_custom_call.1} parent=72 // pred_region
          %s380 = sld [smem:[#allocation2 + $0x1]]
          %s381 = sld [smem:[#allocation2 + $0x2]]
          %s382 = scalar_lea.vmem %s342, %s380 [#allocation8]
          %v383 = vld [vmem:[%s382] sm:$0x7]
          %v384 = vld [vmem:[%s382 + $0x10] sm:$0x7]
          %v385 = vld [vmem:[%s382 + $0x20] sm:$0x7]
          %v386 = vld [vmem:[%s382 + $0x30] sm:$0x7]
          %v387 = vld [vmem:[%s313] sm:$0x7]
          %v388 = vld [vmem:[%s313 + $0x4] sm:$0x7]
          %v389 = vld [vmem:[%s313 + $0x8] sm:$0x7]
          %v390 = vld [vmem:[%s313 + $0xc] sm:$0x7]
          %v391 = vstv %s371
          %v392 = vmul.f32 %v387, %v391
          %v393 = vmul.f32 %v388, %v391
          %v394 = vmul.f32 %v389, %v391
          %v395 = vmul.f32 %v390, %v391
          %v396 = vstv %s370
          %v397 = vadd.f32 %v392, %v396
          %v398 = vadd.f32 %v393, %v396
          %v399 = vadd.f32 %v394, %v396
          %v400 = vadd.f32 %v395, %v396
          %v401 = vstv %s372
          %v402 = vmax.f32 %v401, %v397
          %v403 = vmax.f32 %v401, %v398
          %v404 = vmax.f32 %v401, %v399
          %v405 = vmax.f32 %v401, %v400
          %v406 = vstv %s373
          %v407 = vmin.f32 %v406, %v402
          %v408 = vmin.f32 %v406, %v403
          %v409 = vmin.f32 %v406, %v404
          %v410 = vmin.f32 %v406, %v405
          %v411 = vstv %s381
          %vm412 = vcmp.ge.s32.totalorder %v375, %v411
          %s413 = sadd.s32 %s381, 3
          %v414 = vstv %s413
          %vm415 = vcmp.lt.s32.totalorder %v375, %v414
          %vm416 = vmand %vm412, %vm415
          %v417 = vsel %vm416, 1, 0
          %vm418 = vcmp.eq.s32.totalorder %v417, 1
          %v419 = vsel %vm418, %v407, %v383
          %v420 = vsel %vm418, %v408, %v384
          %v421 = vsel %vm418, %v409, %v385
          %v422 = vsel %vm418, %v410, %v386
          %vm423 = vcmask 124928
          %424 = vst.msk [vmem:[%s382] sm:$0x7] %vm423, %v419
          %425 = vst.msk [vmem:[%s382 + $0x10] sm:$0x7] %vm423, %v420
          %426 = vst.msk [vmem:[%s382 + $0x20] sm:$0x7] %vm423, %v421
          %427 = vst.msk [vmem:[%s382 + $0x30] sm:$0x7] %vm423, %v422
        $region89: #{tpu_custom_call.1} parent=72 // pred_fallthru
          _
        %p428 = scmp.gt.s32.totalorder %s369, 1
        // Predicated region
        $region90: #{tpu_custom_call.1} parent=72 // pred_check
          %p429 = pneg %p428
        $region91: #{tpu_custom_call.1} parent=72 // pred_check_branch
          %431 = sbr.rel (%p429) target = $region93
        $region92: #{tpu_custom_call.1} parent=72 // pred_region
          %s432 = sld [smem:[#allocation2 + $0x3]]
          %s433 = sld [smem:[#allocation2 + $0x4]]
          %s434 = scalar_lea.vmem %s342, %s432 [#allocation8]
          %v435 = vld [vmem:[%s434] sm:$0x7]
          %v436 = vld [vmem:[%s434 + $0x10] sm:$0x7]
          %v437 = vld [vmem:[%s434 + $0x20] sm:$0x7]
          %v438 = vld [vmem:[%s434 + $0x30] sm:$0x7]
          %s439 = scalar_lea.vmem %s313, 16 [#allocation7]
          %v440 = vld [vmem:[%s439] sm:$0x7]
          %v441 = vld [vmem:[%s439 + $0x4] sm:$0x7]
          %v442 = vld [vmem:[%s439 + $0x8] sm:$0x7]
          %v443 = vld [vmem:[%s439 + $0xc] sm:$0x7]
          %v444 = vstv %s371
          %v445 = vmul.f32 %v440, %v444
          %v446 = vmul.f32 %v441, %v444
          %v447 = vmul.f32 %v442, %v444
          %v448 = vmul.f32 %v443, %v444
          %v449 = vstv %s370
          %v450 = vadd.f32 %v445, %v449
          %v451 = vadd.f32 %v446, %v449
          %v452 = vadd.f32 %v447, %v449
          %v453 = vadd.f32 %v448, %v449
          %v454 = vstv %s372
          %v455 = vmax.f32 %v454, %v450
          %v456 = vmax.f32 %v454, %v451
          %v457 = vmax.f32 %v454, %v452
          %v458 = vmax.f32 %v454, %v453
          %v459 = vstv %s373
          %v460 = vmin.f32 %v459, %v455
          %v461 = vmin.f32 %v459, %v456
          %v462 = vmin.f32 %v459, %v457
          %v463 = vmin.f32 %v459, %v458
          %v464 = vstv %s433
          %vm465 = vcmp.ge.s32.totalorder %v375, %v464
          %s466 = sadd.s32 %s433, 3
          %v467 = vstv %s466
          %vm468 = vcmp.lt.s32.totalorder %v375, %v467
          %vm469 = vmand %vm465, %vm468
          %v470 = vsel %vm469, 1, 0
          %vm471 = vcmp.eq.s32.totalorder %v470, 1
          %v472 = vsel %vm471, %v460, %v435
          %v473 = vsel %vm471, %v461, %v436
          %v474 = vsel %vm471, %v462, %v437
          %v475 = vsel %vm471, %v463, %v438
          %vm476 = vcmask 124928
          %477 = vst.msk [vmem:[%s434] sm:$0x7] %vm476, %v472
          %478 = vst.msk [vmem:[%s434 + $0x10] sm:$0x7] %vm476, %v473
          %479 = vst.msk [vmem:[%s434 + $0x20] sm:$0x7] %vm476, %v474
          %480 = vst.msk [vmem:[%s434 + $0x30] sm:$0x7] %vm476, %v475
        $region93: #{tpu_custom_call.1} parent=72 // pred_fallthru
          _
        %p481 = scmp.gt.s32.totalorder %s369, 2
        // Predicated region
        $region94: #{tpu_custom_call.1} parent=72 // pred_check
          %p482 = pneg %p481
        $region95: #{tpu_custom_call.1} parent=72 // pred_check_branch
          %484 = sbr.rel (%p482) target = $region97
        $region96: #{tpu_custom_call.1} parent=72 // pred_region
          %s485 = sld [smem:[#allocation2 + $0x5]]
          %s486 = sld [smem:[#allocation2 + $0x6]]
          %s487 = scalar_lea.vmem %s342, %s485 [#allocation8]
          %v488 = vld [vmem:[%s487] sm:$0x7]
          %v489 = vld [vmem:[%s487 + $0x10] sm:$0x7]
          %v490 = vld [vmem:[%s487 + $0x20] sm:$0x7]
          %v491 = vld [vmem:[%s487 + $0x30] sm:$0x7]
          %s492 = scalar_lea.vmem %s313, 32 [#allocation7]
          %v493 = vld [vmem:[%s492] sm:$0x7]
          %v494 = vld [vmem:[%s492 + $0x4] sm:$0x7]
          %v495 = vld [vmem:[%s492 + $0x8] sm:$0x7]
          %v496 = vld [vmem:[%s492 + $0xc] sm:$0x7]
          %v497 = vstv %s371
          %v498 = vmul.f32 %v493, %v497
          %v499 = vmul.f32 %v494, %v497
          %v500 = vmul.f32 %v495, %v497
          %v501 = vmul.f32 %v496, %v497
          %v502 = vstv %s370
          %v503 = vadd.f32 %v498, %v502
          %v504 = vadd.f32 %v499, %v502
          %v505 = vadd.f32 %v500, %v502
          %v506 = vadd.f32 %v501, %v502
          %v507 = vstv %s372
          %v508 = vmax.f32 %v507, %v503
          %v509 = vmax.f32 %v507, %v504
          %v510 = vmax.f32 %v507, %v505
          %v511 = vmax.f32 %v507, %v506
          %v512 = vstv %s373
          %v513 = vmin.f32 %v512, %v508
          %v514 = vmin.f32 %v512, %v509
          %v515 = vmin.f32 %v512, %v510
          %v516 = vmin.f32 %v512, %v511
          %v517 = vstv %s486
          %vm518 = vcmp.ge.s32.totalorder %v375, %v517
          %s519 = sadd.s32 %s486, 3
          %v520 = vstv %s519
          %vm521 = vcmp.lt.s32.totalorder %v375, %v520
          %vm522 = vmand %vm518, %vm521
          %v523 = vsel %vm522, 1, 0
          %vm524 = vcmp.eq.s32.totalorder %v523, 1
          %v525 = vsel %vm524, %v513, %v488
          %v526 = vsel %vm524, %v514, %v489
          %v527 = vsel %vm524, %v515, %v490
          %v528 = vsel %vm524, %v516, %v491
          %vm529 = vcmask 124928
          %530 = vst.msk [vmem:[%s487] sm:$0x7] %vm529, %v525
          %531 = vst.msk [vmem:[%s487 + $0x10] sm:$0x7] %vm529, %v526
          %532 = vst.msk [vmem:[%s487 + $0x20] sm:$0x7] %vm529, %v527
          %533 = vst.msk [vmem:[%s487 + $0x30] sm:$0x7] %vm529, %v528
        $region97: #{tpu_custom_call.1} parent=72 // pred_fallthru
          _
        %p534 = scmp.gt.s32.totalorder %s369, 3
        // Predicated region
        $region98: #{tpu_custom_call.1} parent=72 // pred_check
          %p535 = pneg %p534
        $region99: #{tpu_custom_call.1} parent=72 // pred_check_branch
          %537 = sbr.rel (%p535) target = $region101
        $region100: #{tpu_custom_call.1} parent=72 // pred_region
          %s538 = sld [smem:[#allocation2 + $0x7]]
          %s539 = sld [smem:[#allocation2 + $0x8]]
          %s540 = scalar_lea.vmem %s342, %s538 [#allocation8]
          %v541 = vld [vmem:[%s540] sm:$0x7]
          %v542 = vld [vmem:[%s540 + $0x10] sm:$0x7]
          %v543 = vld [vmem:[%s540 + $0x20] sm:$0x7]
          %v544 = vld [vmem:[%s540 + $0x30] sm:$0x7]
          %s545 = scalar_lea.vmem %s313, 48 [#allocation7]
          %v546 = vld [vmem:[%s545] sm:$0x7]
          %v547 = vld [vmem:[%s545 + $0x4] sm:$0x7]
          %v548 = vld [vmem:[%s545 + $0x8] sm:$0x7]
          %v549 = vld [vmem:[%s545 + $0xc] sm:$0x7]
          %v550 = vstv %s371
          %v551 = vmul.f32 %v546, %v550
          %v552 = vmul.f32 %v547, %v550
          %v553 = vmul.f32 %v548, %v550
          %v554 = vmul.f32 %v549, %v550
          %v555 = vstv %s370
          %v556 = vadd.f32 %v551, %v555
          %v557 = vadd.f32 %v552, %v555
          %v558 = vadd.f32 %v553, %v555
          %v559 = vadd.f32 %v554, %v555
          %v560 = vstv %s372
          %v561 = vmax.f32 %v560, %v556
          %v562 = vmax.f32 %v560, %v557
          %v563 = vmax.f32 %v560, %v558
          %v564 = vmax.f32 %v560, %v559
          %v565 = vstv %s373
          %v566 = vmin.f32 %v565, %v561
          %v567 = vmin.f32 %v565, %v562
          %v568 = vmin.f32 %v565, %v563
          %v569 = vmin.f32 %v565, %v564
          %v570 = vstv %s539
          %vm571 = vcmp.ge.s32.totalorder %v375, %v570
          %s572 = sadd.s32 %s539, 3
          %v573 = vstv %s572
          %vm574 = vcmp.lt.s32.totalorder %v375, %v573
          %vm575 = vmand %vm571, %vm574
          %v576 = vsel %vm575, 1, 0
          %vm577 = vcmp.eq.s32.totalorder %v576, 1
          %v578 = vsel %vm577, %v566, %v541
          %v579 = vsel %vm577, %v567, %v542
          %v580 = vsel %vm577, %v568, %v543
          %v581 = vsel %vm577, %v569, %v544
          %vm582 = vcmask 124928
          %583 = vst.msk [vmem:[%s540] sm:$0x7] %vm582, %v578
          %584 = vst.msk [vmem:[%s540 + $0x10] sm:$0x7] %vm582, %v579
          %585 = vst.msk [vmem:[%s540 + $0x20] sm:$0x7] %vm582, %v580
          %586 = vst.msk [vmem:[%s540 + $0x30] sm:$0x7] %vm582, %v581
        $region101: #{tpu_custom_call.1} parent=72 // pred_fallthru
          _
        %s587 = sand.u32 %s122, 1
        %s588 = scalar_lea.sflag [#allocation3], %s587
        %s589 = sand.u32 %s122, 1
        %s590 = smul.addr %s589, 64
        %s591 = scalar_lea.vmem [#allocation8], %s590
        // Predicated region
        $region102: #{tpu_custom_call.1} parent=72 // pred_check
          %p592 = pneg %p132
        $region103: #{tpu_custom_call.1} parent=72 // pred_check_branch
          %594 = sbr.rel (%p592) target = $region105
        $region104: #{tpu_custom_call.1} parent=72 // pred_region
          %s595 = smul.u32 4, %s20
          %s597 = ssub.s32 1024, 1024
          %598 = vsyncadd %s588, %s597
          %s599 = smul.addr %s595, 2
          %s600 = smul.addr %s599, 128
          %s601 = scalar_lea.hbm %s4, %s600
          %s602 = sshll.u32 %s591, 4
          %s603 = int_to_ptr.vmem [resolvable:$true] %s602
          %608 = dma.vmem_to_hbm [thread:$0]  %s603, 1024, %s601, %s588, 128, 128, 8
        $region105: #{tpu_custom_call.1} parent=72 // pred_fallthru
          _
      $region73: #{tpu_custom_call.1} parent=5 // pred_fallthru
        _
      %p609 = scmp.le.s32.totalorder 2, %s15
      // Predicated region
      $region106: #{tpu_custom_call.1} parent=5 // pred_check
        %p610 = pneg %p609
      $region107: #{tpu_custom_call.1} parent=5 // pred_check_branch
        %612 = sbr.rel (%p610) target = $region109
      $region108: #{tpu_custom_call.1} parent=5 // pred_region
        %s613 = ssub.s32 %s15, 2
        // Predicated region
        $region110: #{tpu_custom_call.1} parent=108 // pred_check
          %p614 = pneg %p138
        $region111: #{tpu_custom_call.1} parent=108 // pred_check_branch
          %616 = sbr.rel (%p614) target = $region113
        $region112: #{tpu_custom_call.1} parent=108 // pred_region
          %s617 = sand.u32 %s123, 1
          %s618 = scalar_lea.sflag [#allocation3], %s617
          %s619 = sand.u32 %s123, 1
          %s620 = smul.addr %s619, 64
          %s621 = scalar_lea.vmem [#allocation8], %s620
          %622 = dma.done %s618, 1024
        $region113: #{tpu_custom_call.1} parent=108 // pred_fallthru
          _
      $region109: #{tpu_custom_call.1} parent=5 // pred_fallthru
        _
    $region6: #{tpu_custom_call.1} parent=1 // loop_footer
      %s19 = sadd.s32 1, %s15
    $region7: #{tpu_custom_call.1} parent=1 // loop_footer_branch
      %14 = sbr.rel target = $region3
    $region8: #{tpu_custom_call.1} parent=1 // loop_exit
      _
    %623 = vsyncpa [#allocation3], 1
    %s624 = scalar_lea.sflag [#allocation3], 1
    %625 = vsyncpa %s624, 1
    %626 = vsyncpa [#allocation4], 1
    %s627 = scalar_lea.sflag [#allocation4], 1
    %628 = vsyncpa %s627, 1
    %629 = vsyncpa [#allocation6], 1

</llo_original>
